<compile_context>
chip_gen: v6e
topology: v6e:2x2x1
jax: 0.10.0
libtpu: 0.0.40
codegen_flags: <defaults>
</compile_context>

<pallas_src>
import numpy as np
import jax
import jax.numpy as jnp
from jax.experimental import pallas as pl
from jax.experimental.pallas import tpu as pltpu


def _make_conv_relu_kernel(B, H, W, KH, KW, C, OC):
    """Fused conv('same', stride 1, no bias) + ReLU, whole batch in one block."""
    HW = H * W
    ph = (KH - 1) // 2          # PyTorch 'same': left/top pad = (k-1)//2
    pw = (KW - 1) // 2
    # Static lane shift for each tap (dh, dw) on the flattened H*W axis.
    shifts = [(kh - ph) * W + (kw - pw) for kh in range(KH) for kw in range(KW)]

    def kernel(x_ref, w_ref, mask_ref, o_ref):
        # x_ref:    (B, C, HW)   VMEM  activations, spatial dims flattened (lane-dense)
        # w_ref:    (OC, K*C)    VMEM  weights, row-minor order = k*C + c  (matmul LHS)
        # mask_ref: (K, HW)      VMEM  0/1 boundary masks (in-kernel 'same' padding)
        # o_ref:    (B, OC, HW)  VMEM  conv + ReLU output
        w = w_ref[...]
        mask = mask_ref[...]

        # Static unroll over the (small) batch: no grid, no per-step overhead.
        for b in range(B):
            xb = x_ref[b]                                   # (C, HW)

            # One roll (XLU) + one mask vmul per tap, shared across all C channels.
            rows = []
            for k, s in enumerate(shifts):
                if s == 0:
                    t = xb                                  # center tap: mask == 1
                else:
                    t = pltpu.roll(xb, shift=(-s) % HW, axis=1) * mask[k:k + 1, :]
                rows.append(t)
            taps = jnp.concatenate(rows, axis=0)            # (K*C, HW)

            # Single MXU pass does the whole C*K contraction for every out-channel.
            acc = jnp.dot(w, taps, preferred_element_type=jnp.float32)   # (OC, HW)

            # Lane-dense store straight from the accumulator (no stack/relayout).
            o_ref[b] = jnp.maximum(acc, 0.0).astype(o_ref.dtype)

    return kernel


def conv2d_layer(x_nchw, w_oihw):
    """Conv2dLayer.forward: Conv2d(padding='same', stride=1, bias=False) -> ReLU."""
    B, C, H, W = x_nchw.shape
    OC, Cw, KH, KW = w_oihw.shape
    assert Cw == C, "weight in_channels must match input channels"
    HW = H * W
    K = KH * KW
    ph = (KH - 1) // 2
    pw = (KW - 1) // 2

    # Flatten spatial dims so the lane axis is H*W (256 for 16x16: full vregs).
    x_flat = x_nchw.reshape(B, C, HW)

    # Weights reordered so the taps-matrix row index is k*C + c (matmul LHS).
    w_kc = jnp.transpose(w_oihw, (0, 2, 3, 1)).reshape(OC, K * C).astype(jnp.float32)

    # Precomputed 0/1 boundary masks, one per tap: zero 'same' padding in VMEM,
    # no vector int div/mod inside the kernel.
    rows = np.arange(H).reshape(H, 1)
    cols = np.arange(W).reshape(1, W)
    masks = []
    for kh in range(KH):
        dh = kh - ph
        for kw in range(KW):
            dw = kw - pw
            m = ((rows + dh >= 0) & (rows + dh < H) &
                 (cols + dw >= 0) & (cols + dw < W))
            masks.append(m.reshape(HW))
    mask_arr = jnp.asarray(np.stack(masks, axis=0), dtype=jnp.float32)    # (K, HW)

    kernel = _make_conv_relu_kernel(B, H, W, KH, KW, C, OC)

    out_flat = pl.pallas_call(
        kernel,
        out_shape=jax.ShapeDtypeStruct((B, OC, HW), x_nchw.dtype),
        # No grid: everything (a few KiB) lives in VMEM for a single invocation.
        in_specs=[
            pl.BlockSpec(memory_space=pltpu.MemorySpace.VMEM),   # activations
            pl.BlockSpec(memory_space=pltpu.MemorySpace.VMEM),   # weights (matmul LHS)
            pl.BlockSpec(memory_space=pltpu.MemorySpace.VMEM),   # boundary masks
        ],
        out_specs=pl.BlockSpec(memory_space=pltpu.MemorySpace.VMEM),
    )(x_flat, w_kc, mask_arr)

    # TODO(synk): for images too large for VMEM, add an H-tile grid axis with a
    # (KH-1)-row halo, sized against v7x's 64 MiB VMEM (not v6e's 128 MiB).
    return out_flat.reshape(B, OC, H, W)


def _reference(x, w):
    ref = jax.lax.conv_general_dilated(
        x, w, window_strides=(1, 1), padding="SAME",
        dimension_numbers=("NCHW", "OIHW", "NCHW"))
    return jnp.maximum(ref, 0.0)


if __name__ == "__main__":
    key = jax.random.PRNGKey(0)

    # Case 1: module defaults — Conv2dLayer(out_channels=4, 3, 3), in_channels=1.
    k1, k2, k3, k4 = jax.random.split(key, 4)
    B, C, H, W = 2, 1, 16, 16
    OC, KH, KW = 4, 3, 3
    x1 = jax.random.normal(k1, (B, C, H, W), dtype=jnp.float32)
    bound = 1.0 / np.sqrt(C * KH * KW)
    w1 = jax.random.uniform(k2, (OC, C, KH, KW), dtype=jnp.float32,
                            minval=-bound, maxval=bound)
    out1 = jax.block_until_ready(conv2d_layer(x1, w1))
    ref1 = _reference(x1, w1)
    assert out1.shape == (B, OC, H, W)
    assert np.allclose(np.asarray(out1), np.asarray(ref1), rtol=1e-5, atol=1e-5), \
        "Pallas conv+ReLU (C=1) does not match reference"

    # Case 2: multi-channel — exercises the shared roll-per-tap and MXU path.
    B2, C2, OC2 = 2, 4, 8
    x2 = jax.random.normal(k3, (B2, C2, H, W), dtype=jnp.float32)
    bound2 = 1.0 / np.sqrt(C2 * KH * KW)
    w2 = jax.random.uniform(k4, (OC2, C2, KH, KW), dtype=jnp.float32,
                            minval=-bound2, maxval=bound2)
    out2 = jax.block_until_ready(conv2d_layer(x2, w2))
    ref2 = _reference(x2, w2)
    assert out2.shape == (B2, OC2, H, W)
    assert np.allclose(np.asarray(out2), np.asarray(ref2), rtol=1e-5, atol=1e-5), \
        "Pallas conv+ReLU (C=4) does not match reference"

    print("KERNEL_OK")
</pallas_src>

<mosaic_0001>
module attributes {stable_mosaic.version = 11 : i64} {
  func.func @kernel(%arg0: memref<2x1x256xf32, #tpu.memory_space<vmem>>, %arg1: memref<4x9xf32, #tpu.memory_space<vmem>>, %arg2: memref<9x256xf32, #tpu.memory_space<vmem>>, %arg3: memref<2x4x256xf32, #tpu.memory_space<vmem>>) attributes {dimension_semantics = [], scalar_prefetch = 0 : i64, scratch_operands = 0 : i64, tpu.core_type = #tpu.core_type<tc>} {
    %c0 = arith.constant 0 : index
    %c0_0 = arith.constant 0 : index
    %0 = vector.load %arg1[%c0, %c0_0] : memref<4x9xf32, #tpu.memory_space<vmem>>, vector<4x9xf32>
    %c0_1 = arith.constant 0 : index
    %c0_2 = arith.constant 0 : index
    %1 = vector.load %arg2[%c0_1, %c0_2] : memref<9x256xf32, #tpu.memory_space<vmem>>, vector<9x256xf32>
    %c0_3 = arith.constant 0 : index
    %c0_4 = arith.constant 0 : index
    %c0_5 = arith.constant 0 : index
    %2 = vector.load %arg0[%c0_3, %c0_4, %c0_5] : memref<2x1x256xf32, #tpu.memory_space<vmem>>, vector<1x1x256xf32>
    %3 = vector.shape_cast %2 : vector<1x1x256xf32> to vector<1x256xf32>
    %c17_i32 = arith.constant 17 : i32
    %4 = tpu.dynamic_rotate %3 by %c17_i32 dim 1 : vector<1x256xf32>, i32 -> vector<1x256xf32>
    %5 = vector.extract_strided_slice %1 {offsets = [0, 0], sizes = [1, 256], strides = [1, 1]} : vector<9x256xf32> to vector<1x256xf32>
    %6 = arith.mulf %4, %5 : vector<1x256xf32>
    %c16_i32 = arith.constant 16 : i32
    %7 = tpu.dynamic_rotate %3 by %c16_i32 dim 1 : vector<1x256xf32>, i32 -> vector<1x256xf32>
    %8 = vector.extract_strided_slice %1 {offsets = [1, 0], sizes = [1, 256], strides = [1, 1]} : vector<9x256xf32> to vector<1x256xf32>
    %9 = arith.mulf %7, %8 : vector<1x256xf32>
    %c15_i32 = arith.constant 15 : i32
    %10 = tpu.dynamic_rotate %3 by %c15_i32 dim 1 : vector<1x256xf32>, i32 -> vector<1x256xf32>
    %11 = vector.extract_strided_slice %1 {offsets = [2, 0], sizes = [1, 256], strides = [1, 1]} : vector<9x256xf32> to vector<1x256xf32>
    %12 = arith.mulf %10, %11 : vector<1x256xf32>
    %c1_i32 = arith.constant 1 : i32
    %13 = tpu.dynamic_rotate %3 by %c1_i32 dim 1 : vector<1x256xf32>, i32 -> vector<1x256xf32>
    %14 = vector.extract_strided_slice %1 {offsets = [3, 0], sizes = [1, 256], strides = [1, 1]} : vector<9x256xf32> to vector<1x256xf32>
    %15 = arith.mulf %13, %14 : vector<1x256xf32>
    %c255_i32 = arith.constant 255 : i32
    %16 = tpu.dynamic_rotate %3 by %c255_i32 dim 1 : vector<1x256xf32>, i32 -> vector<1x256xf32>
    %17 = vector.extract_strided_slice %1 {offsets = [5, 0], sizes = [1, 256], strides = [1, 1]} : vector<9x256xf32> to vector<1x256xf32>
    %18 = arith.mulf %16, %17 : vector<1x256xf32>
    %c241_i32 = arith.constant 241 : i32
    %19 = tpu.dynamic_rotate %3 by %c241_i32 dim 1 : vector<1x256xf32>, i32 -> vector<1x256xf32>
    %20 = vector.extract_strided_slice %1 {offsets = [6, 0], sizes = [1, 256], strides = [1, 1]} : vector<9x256xf32> to vector<1x256xf32>
    %21 = arith.mulf %19, %20 : vector<1x256xf32>
    %c240_i32 = arith.constant 240 : i32
    %22 = tpu.dynamic_rotate %3 by %c240_i32 dim 1 : vector<1x256xf32>, i32 -> vector<1x256xf32>
    %23 = vector.extract_strided_slice %1 {offsets = [7, 0], sizes = [1, 256], strides = [1, 1]} : vector<9x256xf32> to vector<1x256xf32>
    %24 = arith.mulf %22, %23 : vector<1x256xf32>
    %c239_i32 = arith.constant 239 : i32
    %25 = tpu.dynamic_rotate %3 by %c239_i32 dim 1 : vector<1x256xf32>, i32 -> vector<1x256xf32>
    %26 = vector.extract_strided_slice %1 {offsets = [8, 0], sizes = [1, 256], strides = [1, 1]} : vector<9x256xf32> to vector<1x256xf32>
    %27 = arith.mulf %25, %26 : vector<1x256xf32>
    %28 = tpu.concatenate %6, %9, %12, %15, %3, %18, %21, %24, %27 in 0 : vector<1x256xf32>, vector<1x256xf32>, vector<1x256xf32>, vector<1x256xf32>, vector<1x256xf32>, vector<1x256xf32>, vector<1x256xf32>, vector<1x256xf32>, vector<1x256xf32> -> vector<9x256xf32>
    %cst = arith.constant dense<0.000000e+00> : vector<4x256xf32>
    %29 = tpu.matmul %0, %28, %cst {dimension_numbers = #tpu.dot_dimension_numbers<[1], [0], [0], [1], [0, 0, 1, 1], [], []>} : vector<4x9xf32>, vector<9x256xf32>, vector<4x256xf32> -> vector<4x256xf32>
    %cst_6 = arith.constant 0.000000e+00 : f32
    %30 = vector.broadcast %cst_6 : f32 to vector<4x256xf32>
    %31 = arith.maximumf %29, %30 : vector<4x256xf32>
    %c0_7 = arith.constant 0 : index
    %c0_8 = arith.constant 0 : index
    %c0_9 = arith.constant 0 : index
    %32 = vector.load %arg3[%c0_7, %c0_8, %c0_9] : memref<2x4x256xf32, #tpu.memory_space<vmem>>, vector<1x4x256xf32>
    %33 = vector.shape_cast %32 : vector<1x4x256xf32> to vector<4x256xf32>
    %34 = vector.shape_cast %31 : vector<4x256xf32> to vector<1x4x256xf32>
    tpu.vector_store %arg3[%c0_7, %c0_8, %c0_9], %34 {strides = array<i32>} : memref<2x4x256xf32, #tpu.memory_space<vmem>>, vector<1x4x256xf32>,
    %c1 = arith.constant 1 : index
    %c0_10 = arith.constant 0 : index
    %c0_11 = arith.constant 0 : index
    %35 = vector.load %arg0[%c1, %c0_10, %c0_11] : memref<2x1x256xf32, #tpu.memory_space<vmem>>, vector<1x1x256xf32>
    %36 = vector.shape_cast %35 : vector<1x1x256xf32> to vector<1x256xf32>
    %c17_i32_12 = arith.constant 17 : i32
    %37 = tpu.dynamic_rotate %36 by %c17_i32_12 dim 1 : vector<1x256xf32>, i32 -> vector<1x256xf32>
    %38 = vector.extract_strided_slice %1 {offsets = [0, 0], sizes = [1, 256], strides = [1, 1]} : vector<9x256xf32> to vector<1x256xf32>
    %39 = arith.mulf %37, %38 : vector<1x256xf32>
    %c16_i32_13 = arith.constant 16 : i32
    %40 = tpu.dynamic_rotate %36 by %c16_i32_13 dim 1 : vector<1x256xf32>, i32 -> vector<1x256xf32>
    %41 = vector.extract_strided_slice %1 {offsets = [1, 0], sizes = [1, 256], strides = [1, 1]} : vector<9x256xf32> to vector<1x256xf32>
    %42 = arith.mulf %40, %41 : vector<1x256xf32>
    %c15_i32_14 = arith.constant 15 : i32
    %43 = tpu.dynamic_rotate %36 by %c15_i32_14 dim 1 : vector<1x256xf32>, i32 -> vector<1x256xf32>
    %44 = vector.extract_strided_slice %1 {offsets = [2, 0], sizes = [1, 256], strides = [1, 1]} : vector<9x256xf32> to vector<1x256xf32>
    %45 = arith.mulf %43, %44 : vector<1x256xf32>
    %c1_i32_15 = arith.constant 1 : i32
    %46 = tpu.dynamic_rotate %36 by %c1_i32_15 dim 1 : vector<1x256xf32>, i32 -> vector<1x256xf32>
    %47 = vector.extract_strided_slice %1 {offsets = [3, 0], sizes = [1, 256], strides = [1, 1]} : vector<9x256xf32> to vector<1x256xf32>
    %48 = arith.mulf %46, %47 : vector<1x256xf32>
    %c255_i32_16 = arith.constant 255 : i32
    %49 = tpu.dynamic_rotate %36 by %c255_i32_16 dim 1 : vector<1x256xf32>, i32 -> vector<1x256xf32>
    %50 = vector.extract_strided_slice %1 {offsets = [5, 0], sizes = [1, 256], strides = [1, 1]} : vector<9x256xf32> to vector<1x256xf32>
    %51 = arith.mulf %49, %50 : vector<1x256xf32>
    %c241_i32_17 = arith.constant 241 : i32
    %52 = tpu.dynamic_rotate %36 by %c241_i32_17 dim 1 : vector<1x256xf32>, i32 -> vector<1x256xf32>
    %53 = vector.extract_strided_slice %1 {offsets = [6, 0], sizes = [1, 256], strides = [1, 1]} : vector<9x256xf32> to vector<1x256xf32>
    %54 = arith.mulf %52, %53 : vector<1x256xf32>
    %c240_i32_18 = arith.constant 240 : i32
    %55 = tpu.dynamic_rotate %36 by %c240_i32_18 dim 1 : vector<1x256xf32>, i32 -> vector<1x256xf32>
    %56 = vector.extract_strided_slice %1 {offsets = [7, 0], sizes = [1, 256], strides = [1, 1]} : vector<9x256xf32> to vector<1x256xf32>
    %57 = arith.mulf %55, %56 : vector<1x256xf32>
    %c239_i32_19 = arith.constant 239 : i32
    %58 = tpu.dynamic_rotate %36 by %c239_i32_19 dim 1 : vector<1x256xf32>, i32 -> vector<1x256xf32>
    %59 = vector.extract_strided_slice %1 {offsets = [8, 0], sizes = [1, 256], strides = [1, 1]} : vector<9x256xf32> to vector<1x256xf32>
    %60 = arith.mulf %58, %59 : vector<1x256xf32>
    %61 = tpu.concatenate %39, %42, %45, %48, %36, %51, %54, %57, %60 in 0 : vector<1x256xf32>, vector<1x256xf32>, vector<1x256xf32>, vector<1x256xf32>, vector<1x256xf32>, vector<1x256xf32>, vector<1x256xf32>, vector<1x256xf32>, vector<1x256xf32> -> vector<9x256xf32>
    %cst_20 = arith.constant dense<0.000000e+00> : vector<4x256xf32>
    %62 = tpu.matmul %0, %61, %cst_20 {dimension_numbers = #tpu.dot_dimension_numbers<[1], [0], [0], [1], [0, 0, 1, 1], [], []>} : vector<4x9xf32>, vector<9x256xf32>, vector<4x256xf32> -> vector<4x256xf32>
    %cst_21 = arith.constant 0.000000e+00 : f32
    %63 = vector.broadcast %cst_21 : f32 to vector<4x256xf32>
    %64 = arith.maximumf %62, %63 : vector<4x256xf32>
    %c1_22 = arith.constant 1 : index
    %c0_23 = arith.constant 0 : index
    %c0_24 = arith.constant 0 : index
    %65 = vector.load %arg3[%c1_22, %c0_23, %c0_24] : memref<2x4x256xf32, #tpu.memory_space<vmem>>, vector<1x4x256xf32>
    %66 = vector.shape_cast %65 : vector<1x4x256xf32> to vector<4x256xf32>
    %67 = vector.shape_cast %64 : vector<4x256xf32> to vector<1x4x256xf32>
    tpu.vector_store %arg3[%c1_22, %c0_23, %c0_24], %67 {strides = array<i32>} : memref<2x4x256xf32, #tpu.memory_space<vmem>>, vector<1x4x256xf32>,
    return
  }
}

</mosaic_0001>

<llo_original>
// kernel: tpu_custom_call.1
$region0: #{tpu_custom_call.1}
  #allocation0 [shape = 'u32[]', space=smem, size = 0x4, offset = 0x4, fixed_abs, tag = 'smem constant byte address 0x4 - core index']
  #allocation1 [shape = 'u32[144,128]{1,0:T(1,128)}', space=vmem, size = 0x12000, scoped, tag = 'internal scratch']
  %s0 = inlined_call_operand.hbm [shape: f32[2,1,256], index: 0, kind: input, shape index: {}]
  %s1 = inlined_call_operand.hbm [shape: f32[4,9], index: 1, kind: input, shape index: {}]
  %s2 = inlined_call_operand.hbm [shape: f32[9,256], index: 2, kind: input, shape index: {}]
  %s3 = inlined_call_operand.hbm [shape: f32[2,4,256], index: 3, kind: output, shape index: {}]
  %s4 = sld [smem:[#allocation0]]
  $region34: #{tpu_custom_call.1} parent=0
    _
  %s6 = ssub.s32 1, %s4
  %s7 = scalar_select 0, %s6, %s4
  $region1: #{tpu_custom_call.1} parent=0
    #allocation2 [shape = 'u8[2048]{0}', space=vmem, size = 0x800, scoped, tag = 'input window, operand 0, single buffered']
    #allocation3 [shape = 's32[1]{0}', space=sflag, size = 0x4, scoped, tag = 'scoped memory for tpu_custom_call.1']
    #allocation4 [shape = 's32[1]{0}', space=sflag, size = 0x4, scoped, tag = 'scoped memory for tpu_custom_call.1']
    #allocation5 [shape = 'u8[2048]{0}', space=vmem, size = 0x800, scoped, tag = 'input window, operand 1, single buffered']
    #allocation6 [shape = 's32[1]{0}', space=sflag, size = 0x4, scoped, tag = 'scoped memory for tpu_custom_call.1']
    #allocation7 [shape = 'u8[16384]{0}', space=vmem, size = 0x4000, scoped, tag = 'input window, operand 2, single buffered']
    #allocation8 [shape = 'u8[8192]{0}', space=vmem, size = 0x2000, scoped, tag = 'output window, operand 0, single buffered']
    %8 = vsyncpa [#allocation3], 0
    %9 = vsyncpa [#allocation6], 0
    %10 = vsyncpa [#allocation4], 0
    // Predicated region
    $region2: #{tpu_custom_call.1} parent=1 // pred_check
      _
    $region3: #{tpu_custom_call.1} parent=1 // pred_check_branch
      %12 = sbr.rel (0) target = $region5
    $region4: #{tpu_custom_call.1} parent=1 // pred_region
      %s14 = ssub.s32 64, 64
      %15 = vsyncadd [#allocation3], %s14
      %s16 = sshll.u32 [#allocation2], 4
      %s17 = int_to_ptr.vmem [resolvable:$true] %s16
      %22 = dma.hbm_to_vmem [thread:$0]  %s0, 64, %s17, [#allocation3], 32, 32, 2
    $region5: #{tpu_custom_call.1} parent=1 // pred_fallthru
      _
    // Predicated region
    $region6: #{tpu_custom_call.1} parent=1 // pred_check
      _
    $region7: #{tpu_custom_call.1} parent=1 // pred_check_branch
      %24 = sbr.rel (0) target = $region9
    $region8: #{tpu_custom_call.1} parent=1 // pred_region
      %s26 = ssub.s32 64, 64
      %27 = vsyncadd [#allocation6], %s26
      %s29 = sshll.u32 [#allocation5], 4
      %s30 = int_to_ptr.vmem [resolvable:$true] %s29
      %32 = dma.hbm_to_vmem [thread:$0]  %s1, 64, %s30, [#allocation6]
    $region9: #{tpu_custom_call.1} parent=1 // pred_fallthru
      _
    // Predicated region
    $region10: #{tpu_custom_call.1} parent=1 // pred_check
      _
    $region11: #{tpu_custom_call.1} parent=1 // pred_check_branch
      %34 = sbr.rel (0) target = $region13
    $region12: #{tpu_custom_call.1} parent=1 // pred_region
      %s36 = ssub.s32 512, 512
      %37 = vsyncadd [#allocation6], %s36
      %s38 = sshll.u32 [#allocation7], 4
      %s39 = int_to_ptr.vmem [resolvable:$true] %s38
      %44 = dma.hbm_to_vmem [thread:$0]  %s2, 512, %s39, [#allocation6], 256, 256, 16
    $region13: #{tpu_custom_call.1} parent=1 // pred_fallthru
      _
    // Predicated region
    $region14: #{tpu_custom_call.1} parent=1 // pred_check
      _
    $region15: #{tpu_custom_call.1} parent=1 // pred_check_branch
      %46 = sbr.rel (0) target = $region17
    $region16: #{tpu_custom_call.1} parent=1 // pred_region
      %47 = dma.done [#allocation3], 64
    $region17: #{tpu_custom_call.1} parent=1 // pred_fallthru
      _
    // Predicated region
    $region18: #{tpu_custom_call.1} parent=1 // pred_check
      _
    $region19: #{tpu_custom_call.1} parent=1 // pred_check_branch
      %49 = sbr.rel (0) target = $region21
    $region20: #{tpu_custom_call.1} parent=1 // pred_region
      %50 = dma.done [#allocation6], 64
    $region21: #{tpu_custom_call.1} parent=1 // pred_fallthru
      _
    // Predicated region
    $region22: #{tpu_custom_call.1} parent=1 // pred_check
      _
    $region23: #{tpu_custom_call.1} parent=1 // pred_check_branch
      %52 = sbr.rel (0) target = $region25
    $region24: #{tpu_custom_call.1} parent=1 // pred_region
      %53 = dma.done [#allocation6], 512
    $region25: #{tpu_custom_call.1} parent=1 // pred_fallthru
      _
    %v54 = vld [vmem:[#allocation5] sm:$0xf]
    %v55 = vld [vmem:[#allocation7] sm:$0xff]
    %v56 = vld [vmem:[#allocation7 + $0x8] sm:$0xff]
    %v57 = vld [vmem:[#allocation7 + $0x10] sm:$0x1]
    %v58 = vld [vmem:[#allocation7 + $0x18] sm:$0x1]
    %v59 = vld [vmem:[#allocation2] sm:$0x3]
    %v61 = vlaneseq
    %v62 = vshrl.u32 %v61, 7
    %v63 = vsub.s32 0, %v62
    %v64 = vrot.slane %v59, %v63
    %v65 = vlaneseq
    %v66 = vshrl.u32 %v65, 7
    %v67 = vsub.s32 1, %v66
    %v68 = vrot.slane %v59, %v67
    %71 = vrot.lane.b32.xlu0 %v64, 17
    %v72 = vpop.permute.xlu0 %71
    %73 = vrot.lane.b32.xlu0 %v68, 17
    %v74 = vpop.permute.xlu0 %73
    %v75 = vlaneseq
    %v76 = vand.u32 %v75, 127
    %vm77 = vcmp.lt.s32.totalorder %v76, 17
    %v78 = vsel %vm77, %v72, %v74
    %v79 = vsel %vm77, %v74, %v72
    %v80 = vmul.f32 %v79, %v55
    %v81 = vmul.f32 %v78, %v56
    %82 = vrot.lane.b32.xlu0 %v64, 16
    %v83 = vpop.permute.xlu0 %82
    %84 = vrot.lane.b32.xlu0 %v68, 16
    %v85 = vpop.permute.xlu0 %84
    %vm86 = vcmp.lt.s32.totalorder %v76, 16
    %v87 = vsel %vm86, %v83, %v85
    %v88 = vsel %vm86, %v85, %v83
    %v91 = vrot.slane %v55, 1
    %v92 = vrot.slane %v56, 1
    %v95 = vmul.f32 %v88, %v91
    %v96 = vmul.f32 %v87, %v92
    %97 = vrot.lane.b32.xlu0 %v64, 15
    %v98 = vpop.permute.xlu0 %97
    %99 = vrot.lane.b32.xlu0 %v68, 15
    %v100 = vpop.permute.xlu0 %99
    %vm101 = vcmp.lt.s32.totalorder %v76, 15
    %v102 = vsel %vm101, %v98, %v100
    %v103 = vsel %vm101, %v100, %v98
    %v104 = vrot.slane %v55, 2
    %v105 = vrot.slane %v56, 2
    %v108 = vmul.f32 %v103, %v104
    %v109 = vmul.f32 %v102, %v105
    %110 = vrot.lane.b32.xlu0 %v64, 1
    %v111 = vpop.permute.xlu0 %110
    %112 = vrot.lane.b32.xlu0 %v68, 1
    %v113 = vpop.permute.xlu0 %112
    %vm114 = vcmp.lt.s32.totalorder %v76, 1
    %v115 = vsel %vm114, %v111, %v113
    %v116 = vsel %vm114, %v113, %v111
    %v117 = vrot.slane %v55, 3
    %v118 = vrot.slane %v56, 3
    %v121 = vmul.f32 %v116, %v117
    %v122 = vmul.f32 %v115, %v118
    %123 = vrot.lane.b32.xlu0 %v64, 127
    %v124 = vpop.permute.xlu0 %123
    %125 = vrot.lane.b32.xlu0 %v68, 127
    %v126 = vpop.permute.xlu0 %125
    %vm127 = vcmp.lt.s32.totalorder %v76, 127
    %v128 = vsel %vm127, %v124, %v126
    %v129 = vsel %vm127, %v126, %v124
    %v130 = vrot.slane %v55, 5
    %v131 = vrot.slane %v56, 5
    %v134 = vmul.f32 %v128, %v130
    %v135 = vmul.f32 %v129, %v131
    %136 = vrot.lane.b32.xlu0 %v64, 113
    %v137 = vpop.permute.xlu0 %136
    %138 = vrot.lane.b32.xlu0 %v68, 113
    %v139 = vpop.permute.xlu0 %138
    %vm140 = vcmp.lt.s32.totalorder %v76, 113
    %v141 = vsel %vm140, %v137, %v139
    %v142 = vsel %vm140, %v139, %v137
    %v143 = vrot.slane %v55, 6
    %v144 = vrot.slane %v56, 6
    %v147 = vmul.f32 %v141, %v143
    %v148 = vmul.f32 %v142, %v144
    %149 = vrot.lane.b32.xlu0 %v64, 112
    %v150 = vpop.permute.xlu0 %149
    %151 = vrot.lane.b32.xlu0 %v68, 112
    %v152 = vpop.permute.xlu0 %151
    %vm153 = vcmp.lt.s32.totalorder %v76, 112
    %v154 = vsel %vm153, %v150, %v152
    %v155 = vsel %vm153, %v152, %v150
    %v156 = vrot.slane %v55, 7
    %v157 = vrot.slane %v56, 7
    %v160 = vmul.f32 %v154, %v156
    %v161 = vmul.f32 %v155, %v157
    %162 = vrot.lane.b32.xlu0 %v64, 111
    %v163 = vpop.permute.xlu0 %162
    %164 = vrot.lane.b32.xlu0 %v68, 111
    %v165 = vpop.permute.xlu0 %164
    %vm166 = vcmp.lt.s32.totalorder %v76, 111
    %v167 = vsel %vm166, %v163, %v165
    %v168 = vsel %vm166, %v165, %v163
    %v169 = vmul.f32 %v167, %v57
    %v170 = vmul.f32 %v168, %v58
    %v173 = vrot.slane %v95, 7
    %v174 = vrot.slane %v96, 7
    %v179 = vrot.slane %v108, 6
    %v180 = vrot.slane %v109, 6
    %v185 = vrot.slane %v121, 5
    %v186 = vrot.slane %v122, 5
    %v191 = vrot.slane %v134, 3
    %v192 = vrot.slane %v135, 3
    %v197 = vrot.slane %v147, 2
    %v198 = vrot.slane %v148, 2
    %v203 = vrot.slane %v160, 1
    %v204 = vrot.slane %v161, 1
    %vm207 = vcmask 1040384
    %v208 = vsel %vm207, %v80, %v173
    %v209 = vsel %vm207, %v81, %v174
    %vm210 = vcmask 1041408
    %v211 = vsel %vm210, %v208, %v179
    %v212 = vsel %vm210, %v209, %v180
    %vm213 = vcmask 1042432
    %v214 = vsel %vm213, %v211, %v185
    %v215 = vsel %vm213, %v212, %v186
    %vm216 = vcmask 1043456
    %v217 = vsel %vm216, %v214, %v64
    %v218 = vsel %vm216, %v215, %v68
    %vm219 = vcmask 1044480
    %v220 = vsel %vm219, %v217, %v191
    %v221 = vsel %vm219, %v218, %v192
    %vm222 = vcmask 1045504
    %v223 = vsel %vm222, %v220, %v197
    %v224 = vsel %vm222, %v221, %v198
    %vm225 = vcmask 1046528
    %v226 = vsel %vm225, %v223, %v203
    %v227 = vsel %vm225, %v224, %v204
    %vm228 = vcmask 72704
    %v230 = vsel %vm228, %v54, 0
    %v233 = vsel %vm207, %v169, 0
    %v236 = vsel %vm207, %v170, 0
    %238 = vmatprep.subr.mxu0 0.0
    %239 = vmatpush1.msra.mxu0 0.0
    %240 = vmatprep.subr.mxu0 0.0
    %241 = vmatpush1.msra.mxu0 0.0
    %242 = vmatprep.subr.mxu0 0.0
    %243 = vmatpush1.msra.mxu0 0.0
    %244 = vmatprep.subr.mxu0 0.0
    %245 = vmatpush1.msra.mxu0 0.0
    %246 = vmatprep.subr.mxu0 0.0
    %247 = vmatpush1.msra.mxu0 0.0
    %248 = vmatprep.subr.mxu0 0.0
    %249 = vmatpush1.msra.mxu0 0.0
    %250 = vmatprep.subr.mxu0 0.0
    %251 = vmatpush1.msra.mxu0 0.0
    %252 = vmatprep.subr.mxu0 0.0
    %253 = vmatpush1.msra.mxu0 0.0
    %254 = vmatprep.subr.mxu0 0.0
    %255 = vmatpush1.msra.mxu0 0.0
    %256 = vmatprep.subr.mxu0 0.0
    %257 = vmatpush1.msra.mxu0 0.0
    %258 = vmatprep.subr.mxu0 0.0
    %259 = vmatpush1.msra.mxu0 0.0
    %260 = vmatprep.subr.mxu0 0.0
    %261 = vmatpush1.msra.mxu0 0.0
    %262 = vmatprep.subr.mxu0 0.0
    %263 = vmatpush1.msra.mxu0 0.0
    %264 = vmatprep.subr.mxu0 0.0
    %265 = vmatpush1.msra.mxu0 0.0
    %266 = vmatprep.subr.mxu0 %v236
    %267 = vmatpush1.msra.mxu0 %v233
    %268 = vmatprep.subr.mxu0 %v227
    %269 = vmatpush1.msra.mxu0 %v226
    %270 = vmatprep.subr.mxu0 0.0
    %271 = vmatpush2.msra.mxu0 0.0
    %272 = vmatprep.subr.mxu0 0.0
    %273 = vmatpush2.msra.mxu0 0.0
    %274 = vmatprep.subr.mxu0 0.0
    %275 = vmatpush2.msra.mxu0 0.0
    %276 = vmatprep.subr.mxu0 0.0
    %277 = vmatpush2.msra.mxu0 0.0
    %278 = vmatprep.subr.mxu0 0.0
    %279 = vmatpush2.msra.mxu0 0.0
    %280 = vmatprep.subr.mxu0 0.0
    %281 = vmatpush2.msra.mxu0 0.0
    %282 = vmatprep.subr.mxu0 0.0
    %283 = vmatpush2.msra.mxu0 0.0
    %284 = vmatprep.subr.mxu0 0.0
    %285 = vmatpush2.msra.mxu0 0.0
    %286 = vmatprep.subr.mxu0 0.0
    %287 = vmatpush2.msra.mxu0 0.0
    %288 = vmatprep.subr.mxu0 0.0
    %289 = vmatpush2.msra.mxu0 0.0
    %290 = vmatprep.subr.mxu0 0.0
    %291 = vmatpush2.msra.mxu0 0.0
    %292 = vmatprep.subr.mxu0 0.0
    %293 = vmatpush2.msra.mxu0 0.0
    %294 = vmatprep.subr.mxu0 0.0
    %295 = vmatpush2.msra.mxu0 0.0
    %296 = vmatprep.subr.mxu0 0.0
    %297 = vmatpush2.msra.mxu0 0.0
    %298 = vmatprep.subr.mxu0 0.0
    %299 = vmatpush2.msra.mxu0 0.0
    %300 = vmatprep.subr.mxu0 0.0
    %301 = vmatpush2.msra.mxu0 0.0
    %302 = vmatprep.mubr.f32.mxu0 0.0
    %303 = vmatmul.mubr.f32.gmra.mxu0 %v230
    %v304 = vpop.f32.mrf.mxu0
    %v305 = vadd.f32 0.0, %v304
    %v306 = vpop.f32.mrf.mxu0
    %v307 = vadd.f32 0.0, %v306
    %308 = vdwg.mxu0
    %v309 = vmax.f32 %v305, 0.0
    %v310 = vmax.f32 %v307, 0.0
    %v313 = vcombine.low %v309, %v310
    %315 = vst [vmem:[#allocation8] sm:$0xff] %v313
    %s316 = scalar_lea.vmem [#allocation2], 2
    %v317 = vld [vmem:[%s316] sm:$0x3]
    %v319 = vlaneseq
    %v320 = vshrl.u32 %v319, 7
    %v321 = vsub.s32 0, %v320
    %v322 = vrot.slane %v317, %v321
    %v323 = vlaneseq
    %v324 = vshrl.u32 %v323, 7
    %v325 = vsub.s32 1, %v324
    %v326 = vrot.slane %v317, %v325
    %329 = vrot.lane.b32.xlu0 %v322, 17
    %v330 = vpop.permute.xlu0 %329
    %331 = vrot.lane.b32.xlu0 %v326, 17
    %v332 = vpop.permute.xlu0 %331
    %v333 = vsel %vm77, %v330, %v332
    %v334 = vsel %vm77, %v332, %v330
    %v335 = vmul.f32 %v334, %v55
    %v336 = vmul.f32 %v333, %v56
    %337 = vrot.lane.b32.xlu0 %v322, 16
    %v338 = vpop.permute.xlu0 %337
    %339 = vrot.lane.b32.xlu0 %v326, 16
    %v340 = vpop.permute.xlu0 %339
    %v341 = vsel %vm86, %v338, %v340
    %v342 = vsel %vm86, %v340, %v338
    %v343 = vmul.f32 %v342, %v91
    %v344 = vmul.f32 %v341, %v92
    %345 = vrot.lane.b32.xlu0 %v322, 15
    %v346 = vpop.permute.xlu0 %345
    %347 = vrot.lane.b32.xlu0 %v326, 15
    %v348 = vpop.permute.xlu0 %347
    %v349 = vsel %vm101, %v346, %v348
    %v350 = vsel %vm101, %v348, %v346
    %v351 = vmul.f32 %v350, %v104
    %v352 = vmul.f32 %v349, %v105
    %353 = vrot.lane.b32.xlu0 %v322, 1
    %v354 = vpop.permute.xlu0 %353
    %355 = vrot.lane.b32.xlu0 %v326, 1
    %v356 = vpop.permute.xlu0 %355
    %v357 = vsel %vm114, %v354, %v356
    %v358 = vsel %vm114, %v356, %v354
    %v359 = vmul.f32 %v358, %v117
    %v360 = vmul.f32 %v357, %v118
    %361 = vrot.lane.b32.xlu0 %v322, 127
    %v362 = vpop.permute.xlu0 %361
    %363 = vrot.lane.b32.xlu0 %v326, 127
    %v364 = vpop.permute.xlu0 %363
    %v365 = vsel %vm127, %v362, %v364
    %v366 = vsel %vm127, %v364, %v362
    %v367 = vmul.f32 %v365, %v130
    %v368 = vmul.f32 %v366, %v131
    %369 = vrot.lane.b32.xlu0 %v322, 113
    %v370 = vpop.permute.xlu0 %369
    %371 = vrot.lane.b32.xlu0 %v326, 113
    %v372 = vpop.permute.xlu0 %371
    %v373 = vsel %vm140, %v370, %v372
    %v374 = vsel %vm140, %v372, %v370
    %v375 = vmul.f32 %v373, %v143
    %v376 = vmul.f32 %v374, %v144
    %377 = vrot.lane.b32.xlu0 %v322, 112
    %v378 = vpop.permute.xlu0 %377
    %379 = vrot.lane.b32.xlu0 %v326, 112
    %v380 = vpop.permute.xlu0 %379
    %v381 = vsel %vm153, %v378, %v380
    %v382 = vsel %vm153, %v380, %v378
    %v383 = vmul.f32 %v381, %v156
    %v384 = vmul.f32 %v382, %v157
    %385 = vrot.lane.b32.xlu0 %v322, 111
    %v386 = vpop.permute.xlu0 %385
    %387 = vrot.lane.b32.xlu0 %v326, 111
    %v388 = vpop.permute.xlu0 %387
    %v389 = vsel %vm166, %v386, %v388
    %v390 = vsel %vm166, %v388, %v386
    %v391 = vmul.f32 %v389, %v57
    %v392 = vmul.f32 %v390, %v58
    %v395 = vrot.slane %v343, 7
    %v396 = vrot.slane %v344, 7
    %v401 = vrot.slane %v351, 6
    %v402 = vrot.slane %v352, 6
    %v407 = vrot.slane %v359, 5
    %v408 = vrot.slane %v360, 5
    %v413 = vrot.slane %v367, 3
    %v414 = vrot.slane %v368, 3
    %v419 = vrot.slane %v375, 2
    %v420 = vrot.slane %v376, 2
    %v425 = vrot.slane %v383, 1
    %v426 = vrot.slane %v384, 1
    %v429 = vsel %vm207, %v335, %v395
    %v430 = vsel %vm207, %v336, %v396
    %v431 = vsel %vm210, %v429, %v401
    %v432 = vsel %vm210, %v430, %v402
    %v433 = vsel %vm213, %v431, %v407
    %v434 = vsel %vm213, %v432, %v408
    %v435 = vsel %vm216, %v433, %v322
    %v436 = vsel %vm216, %v434, %v326
    %v437 = vsel %vm219, %v435, %v413
    %v438 = vsel %vm219, %v436, %v414
    %v439 = vsel %vm222, %v437, %v419
    %v440 = vsel %vm222, %v438, %v420
    %v441 = vsel %vm225, %v439, %v425
    %v442 = vsel %vm225, %v440, %v426
    %v444 = vsel %vm207, %v391, 0
    %v447 = vsel %vm207, %v392, 0
    %449 = vmatprep.subr.mxu0 0.0
    %450 = vmatpush1.msra.mxu0 0.0
    %451 = vmatprep.subr.mxu0 0.0
    %452 = vmatpush1.msra.mxu0 0.0
    %453 = vmatprep.subr.mxu0 0.0
    %454 = vmatpush1.msra.mxu0 0.0
    %455 = vmatprep.subr.mxu0 0.0
    %456 = vmatpush1.msra.mxu0 0.0
    %457 = vmatprep.subr.mxu0 0.0
    %458 = vmatpush1.msra.mxu0 0.0
    %459 = vmatprep.subr.mxu0 0.0
    %460 = vmatpush1.msra.mxu0 0.0
    %461 = vmatprep.subr.mxu0 0.0
    %462 = vmatpush1.msra.mxu0 0.0
    %463 = vmatprep.subr.mxu0 0.0
    %464 = vmatpush1.msra.mxu0 0.0
    %465 = vmatprep.subr.mxu0 0.0
    %466 = vmatpush1.msra.mxu0 0.0
    %467 = vmatprep.subr.mxu0 0.0
    %468 = vmatpush1.msra.mxu0 0.0
    %469 = vmatprep.subr.mxu0 0.0
    %470 = vmatpush1.msra.mxu0 0.0
    %471 = vmatprep.subr.mxu0 0.0
    %472 = vmatpush1.msra.mxu0 0.0
    %473 = vmatprep.subr.mxu0 0.0
    %474 = vmatpush1.msra.mxu0 0.0
    %475 = vmatprep.subr.mxu0 0.0
    %476 = vmatpush1.msra.mxu0 0.0
    %477 = vmatprep.subr.mxu0 %v447
    %478 = vmatpush1.msra.mxu0 %v444
    %479 = vmatprep.subr.mxu0 %v442
    %480 = vmatpush1.msra.mxu0 %v441
    %481 = vmatprep.subr.mxu0 0.0
    %482 = vmatpush2.msra.mxu0 0.0
    %483 = vmatprep.subr.mxu0 0.0
    %484 = vmatpush2.msra.mxu0 0.0
    %485 = vmatprep.subr.mxu0 0.0
    %486 = vmatpush2.msra.mxu0 0.0
    %487 = vmatprep.subr.mxu0 0.0
    %488 = vmatpush2.msra.mxu0 0.0
    %489 = vmatprep.subr.mxu0 0.0
    %490 = vmatpush2.msra.mxu0 0.0
    %491 = vmatprep.subr.mxu0 0.0
    %492 = vmatpush2.msra.mxu0 0.0
    %493 = vmatprep.subr.mxu0 0.0
    %494 = vmatpush2.msra.mxu0 0.0
    %495 = vmatprep.subr.mxu0 0.0
    %496 = vmatpush2.msra.mxu0 0.0
    %497 = vmatprep.subr.mxu0 0.0
    %498 = vmatpush2.msra.mxu0 0.0
    %499 = vmatprep.subr.mxu0 0.0
    %500 = vmatpush2.msra.mxu0 0.0
    %501 = vmatprep.subr.mxu0 0.0
    %502 = vmatpush2.msra.mxu0 0.0
    %503 = vmatprep.subr.mxu0 0.0
    %504 = vmatpush2.msra.mxu0 0.0
    %505 = vmatprep.subr.mxu0 0.0
    %506 = vmatpush2.msra.mxu0 0.0
    %507 = vmatprep.subr.mxu0 0.0
    %508 = vmatpush2.msra.mxu0 0.0
    %509 = vmatprep.subr.mxu0 0.0
    %510 = vmatpush2.msra.mxu0 0.0
    %511 = vmatprep.subr.mxu0 0.0
    %512 = vmatpush2.msra.mxu0 0.0
    %513 = vmatprep.mubr.f32.mxu0 0.0
    %514 = vmatmul.mubr.f32.gmra.mxu0 %v230
    %v515 = vpop.f32.mrf.mxu0
    %v516 = vadd.f32 0.0, %v515
    %v517 = vpop.f32.mrf.mxu0
    %v518 = vadd.f32 0.0, %v517
    %519 = vdwg.mxu0
    %v520 = vmax.f32 %v516, 0.0
    %v521 = vmax.f32 %v518, 0.0
    %v524 = vcombine.low %v520, %v521
    %s526 = scalar_lea.vmem [#allocation8], 8
    %527 = vst [vmem:[%s526] sm:$0xff] %v524
    // Predicated region
    $region26: #{tpu_custom_call.1} parent=1 // pred_check
      _
    $region27: #{tpu_custom_call.1} parent=1 // pred_check_branch
      %529 = sbr.rel (0) target = $region29
    $region28: #{tpu_custom_call.1} parent=1 // pred_region
      %s531 = ssub.s32 256, 256
      %532 = vsyncadd [#allocation4], %s531
      %s533 = sshll.u32 [#allocation8], 4
      %s534 = int_to_ptr.vmem [resolvable:$true] %s533
      %539 = dma.vmem_to_hbm [thread:$0]  %s534, 256, %s3, [#allocation4], 128, 128, 8
    $region29: #{tpu_custom_call.1} parent=1 // pred_fallthru
      _
    // Predicated region
    $region30: #{tpu_custom_call.1} parent=1 // pred_check
      _
    $region31: #{tpu_custom_call.1} parent=1 // pred_check_branch
      %541 = sbr.rel (0) target = $region33
    $region32: #{tpu_custom_call.1} parent=1 // pred_region
      %542 = dma.done [#allocation4], 256
    $region33: #{tpu_custom_call.1} parent=1 // pred_fallthru
      _
    %543 = vsyncpa [#allocation3], 1
    %544 = vsyncpa [#allocation6], 1
    %545 = vsyncpa [#allocation4], 1

</llo_original>
